<compile_context>
chip_gen: v7x
topology: tpu7x:2x2x1
jax: 0.10.0
libtpu: 0.0.40
codegen_flags: <defaults>
</compile_context>

<pallas_src>
import functools

import jax
import jax.numpy as jnp
from jax import lax
from jax.experimental import pallas as pl
from jax.experimental.pallas import tpu as pltpu

MARGIN = 0.2
LANES = 128
SUBLANES = 8


def _accumulate(acc_ref, vals, block_rows):
    """acc_ref (8,128) += per-lane/sublane partial sums of vals (block_rows,128).

    Pure VPU adds (sum over the leading axis of a (k,8,128) view crosses vregs,
    not lanes); no XLU work in the steady state.
    """
    main = (block_rows // SUBLANES) * SUBLANES
    if main:
        body = vals if main == block_rows else vals[:main]
        acc_ref[...] += body.reshape(main // SUBLANES, SUBLANES, LANES).sum(axis=0)
    rem = block_rows - main
    if rem:  # only possible for small single-block inputs (block_rows == rows)
        acc_ref[0:rem, :] += vals[main:]


def _margin_loss_kernel(alpha_ref, a_ref, b_ref, out_ref, acc_ref, *,
                        n, block_rows, margin, inv_n, reduce_out):
    c = pl.program_id(0)              # core slice ("parallel")
    i = pl.program_id(1)              # row-block within the slice ("arbitrary")
    nblk = pl.num_programs(1)

    @pl.when(i == 0)
    def _init():
        acc_ref[...] = jnp.zeros_like(acc_ref)

    # Upcast in-register: inputs stay in their native dtype on the wire.
    a = a_ref[...].astype(jnp.float32)
    b = b_ref[...].astype(jnp.float32)
    # margin_ranking_loss with y = 1: max(0, -(a-b)+margin) = max(0, b-a+margin)
    hinge = jnp.maximum(b - a + margin, 0.0)

    # Global row offset of this block (n, block_rows, LANES are static ints;
    # fine for n < 2**31 elements).
    start_row = (c * nblk + i) * block_rows
    block_end = (start_row + block_rows) * LANES

    @pl.when(block_end <= n)          # fast path: block fully valid, no mask
    def _full():
        _accumulate(acc_ref, hinge, block_rows)

    @pl.when(block_end > n)           # boundary / duplicate block: mask invalid
    def _ragged():
        row = lax.broadcasted_iota(jnp.int32, (block_rows, LANES), 0)
        col = lax.broadcasted_iota(jnp.int32, (block_rows, LANES), 1)
        idx = (start_row + row) * LANES + col
        _accumulate(acc_ref, jnp.where(idx < n, hinge, 0.0), block_rows)

    @pl.when(i == nblk - 1)
    def _finalize():
        scale = alpha_ref[0] * inv_n        # alpha / n, alpha from SMEM
        if reduce_out:
            # Single-slice case: fully fused epilogue, output is the loss.
            out_ref[...] = jnp.sum(acc_ref[...] * scale, keepdims=True)
        else:
            # Per-core (8,128) scaled partials; summed by one tiny op outside.
            out_ref[...] = acc_ref[...] * scale


def margin_kl_loss(a, b, alpha, beta, *, margin=MARGIN,
                   max_block_rows=8192, num_cores=2):
    """Forward pass of MarginKLLoss: alpha * mean(max(0, b - a + margin)).

    a, b: same-shape float arrays; alpha, beta: (1,) parameters.
    Returns a (1,) float32 array.  The KL term of the reference module is
    multiplied by 0 and therefore does not affect the forward value.
    """
    del beta  # KL branch is multiplied by 0 in the reference forward.
    # TODO(synk): if the KL term ever stops being multiplied by 0 in the
    # reference, add a fused symmetric-KL kernel over the original last dim.
    assert a.shape == b.shape
    n = a.size

    # Lane-dense (rows, 128) views in the native dtype.  This reshape is a
    # free bitcast whenever n % 128 == 0 (true for the module's 8x32 input);
    # otherwise pad the flat array up to the next multiple of 128 (the only
    # remaining wrapper-side copy; pad values are masked out in-kernel).
    rows = pl.cdiv(n, LANES)
    padded = rows * LANES
    if padded == n:
        a2 = a.reshape(rows, LANES)
        b2 = b.reshape(rows, LANES)
    else:
        a2 = jnp.pad(a.reshape(-1), (0, padded - n)).reshape(rows, LANES)
        b2 = jnp.pad(b.reshape(-1), (0, padded - n)).reshape(rows, LANES)

    # Block / grid selection.
    if rows <= max_block_rows:
        block_rows = rows                       # full-dim block (always legal)
    else:
        block_rows = (max_block_rows // SUBLANES) * SUBLANES  # multiple of 8
    blocks_total = pl.cdiv(rows, block_rows)
    num_slices = num_cores if blocks_total >= num_cores else 1
    blocks_per_slice = pl.cdiv(blocks_total, num_slices)
    last_block = blocks_total - 1
    reduce_out = (num_slices == 1)

    def in_map(c, i):
        # Clamp so a (rare) fully-out-of-range block re-reads the last valid
        # block instead of issuing an OOB DMA; its contribution is masked to 0.
        return (jnp.minimum(c * blocks_per_slice + i, last_block), 0)

    in_block = pl.BlockSpec((block_rows, LANES), in_map)

    if reduce_out:
        out_shape = jax.ShapeDtypeStruct((1, 1), jnp.float32)
        out_spec = pl.BlockSpec((1, 1), lambda c, i: (0, 0))
    else:
        out_shape = jax.ShapeDtypeStruct((num_slices * SUBLANES, LANES),
                                         jnp.float32)
        out_spec = pl.BlockSpec((SUBLANES, LANES), lambda c, i: (c, 0))

    alpha32 = jnp.asarray(alpha, jnp.float32).reshape(1)

    kernel = functools.partial(
        _margin_loss_kernel, n=n, block_rows=block_rows, margin=float(margin),
        inv_n=float(1.0 / n), reduce_out=reduce_out)

    out = pl.pallas_call(
        kernel,
        out_shape=out_shape,
        grid_spec=pltpu.PrefetchScalarGridSpec(
            num_scalar_prefetch=0,
            grid=(num_slices, blocks_per_slice),
            in_specs=[
                pl.BlockSpec(memory_space=pltpu.MemorySpace.SMEM),  # alpha
                in_block,                                           # a tiles
                in_block,                                           # b tiles
            ],
            out_specs=out_spec,
            scratch_shapes=[pltpu.VMEM((SUBLANES, LANES), jnp.float32)],
        ),
        compiler_params=pltpu.CompilerParams(
            dimension_semantics=("parallel", "arbitrary"),
            vmem_limit_bytes=40 * 1024 * 1024,
        ),
    )(alpha32, a2, b2)

    if reduce_out:
        return out.reshape(1)
    return jnp.sum(out).reshape(1)


if __name__ == "__main__":
    key = jax.random.PRNGKey(0)
    k1, k2 = jax.random.split(key)

    # Shapes consistent with the module's forward: (batch, logits).
    B, D = 8, 32
    a = jax.random.normal(k1, (B, D), dtype=jnp.float32)
    b = jax.random.normal(k2, (B, D), dtype=jnp.float32)

    # Parameters exactly as in __init__: alpha = beta = 0.0
    alpha = jnp.zeros((1,), dtype=jnp.float32)
    beta = jnp.zeros((1,), dtype=jnp.float32)

    out = margin_kl_loss(a, b, alpha, beta)
    jax.block_until_ready(out)

    # Numerical checks against a pure-JAX reference with nonzero alpha (so the
    # margin path is actually exercised; with alpha=0 both are trivially 0).
    def ref(aa, bb, al):
        return al * jnp.mean(jnp.maximum(bb - aa + MARGIN, 0.0))

    alpha_t = jnp.full((1,), 0.7, dtype=jnp.float32)
    ok = True

    # 1) module shape (n % 128 == 0, single block, fully fused epilogue).
    got = margin_kl_loss(a, b, alpha_t, beta)
    ok &= bool(jnp.allclose(got, ref(a, b, alpha_t), rtol=1e-5, atol=1e-6))

    # 2) ragged element count (exercises the in-kernel boundary mask).
    a2 = jax.random.normal(k1, (5, 7), dtype=jnp.float32)
    b2 = jax.random.normal(k2, (5, 7), dtype=jnp.float32)
    got = margin_kl_loss(a2, b2, alpha_t, beta)
    ok &= bool(jnp.allclose(got, ref(a2, b2, alpha_t), rtol=1e-5, atol=1e-6))

    # 3) multi-block + dual-slice grid + odd block count (index clamp path),
    #    exercised at a small shape by shrinking the block size.
    a3 = jax.random.normal(k1, (64, 256), dtype=jnp.float32)
    b3 = jax.random.normal(k2, (64, 256), dtype=jnp.float32)
    got = margin_kl_loss(a3, b3, alpha_t, beta, max_block_rows=48)
    ok &= bool(jnp.allclose(got, ref(a3, b3, alpha_t), rtol=1e-5, atol=1e-6))

    jax.block_until_ready(got)
    assert ok, "Pallas kernel does not match the pure-JAX reference"
    print("KERNEL_OK")
</pallas_src>

<mosaic_0001>
module attributes {stable_mosaic.version = 11 : i64} {
  func.func @_margin_loss_kernel(%arg0: i32, %arg1: i32, %arg2: memref<1xf32, #tpu.memory_space<smem>>, %arg3: memref<2x128xf32, #tpu.memory_space<vmem>>, %arg4: memref<2x128xf32, #tpu.memory_space<vmem>>, %arg5: memref<1x1xf32, #tpu.memory_space<vmem>>, %arg6: memref<8x128xf32, #tpu.memory_space<vmem>>) attributes {dimension_semantics = [#tpu.dimension_semantics<parallel>, #tpu.dimension_semantics<arbitrary>], iteration_bounds = array<i64: 1, 1>, scalar_prefetch = 0 : i64, scratch_operands = 1 : i64, tpu.core_type = #tpu.core_type<tc>, window_params = [{transform_indices = @transform_0, window_bounds = array<i64: 1>}, {transform_indices = @transform_1, window_bounds = array<i64: 2, 128>}, {transform_indices = @transform_2, window_bounds = array<i64: 2, 128>}, {pipeline_mode = #tpu.pipeline_mode<synchronous>, transform_indices = @transform_3, window_bounds = array<i64: 1, 1>}]} {
    %c0_i32 = arith.constant 0 : i32
    %0 = arith.cmpi eq, %arg1, %c0_i32 : i32
    %1 = arith.extui %0 : i1 to i32
    %c0_i32_0 = arith.constant 0 : i32
    %2 = arith.cmpi ne, %1, %c0_i32_0 : i32
    scf.if %2 {
      %cst_11 = arith.constant 0.000000e+00 : f32
      %24 = vector.broadcast %cst_11 : f32 to vector<8x128xf32>
      %c0_12 = arith.constant 0 : index
      %c0_13 = arith.constant 0 : index
      %25 = vector.load %arg6[%c0_12, %c0_13] : memref<8x128xf32, #tpu.memory_space<vmem>>, vector<8x128xf32>
      tpu.vector_store %arg6[%c0_12, %c0_13], %24 {strides = array<i32>} : memref<8x128xf32, #tpu.memory_space<vmem>>, vector<8x128xf32>,
    } else {
    }
    %c0 = arith.constant 0 : index
    %c0_1 = arith.constant 0 : index
    %3 = vector.load %arg3[%c0, %c0_1] : memref<2x128xf32, #tpu.memory_space<vmem>>, vector<2x128xf32>
    %c0_2 = arith.constant 0 : index
    %c0_3 = arith.constant 0 : index
    %4 = vector.load %arg4[%c0_2, %c0_3] : memref<2x128xf32, #tpu.memory_space<vmem>>, vector<2x128xf32>
    %5 = arith.subf %4, %3 : vector<2x128xf32>
    %cst = arith.constant 2.000000e-01 : f32
    %6 = vector.broadcast %cst : f32 to vector<2x128xf32>
    %7 = arith.addf %5, %6 : vector<2x128xf32>
    %cst_4 = arith.constant 0.000000e+00 : f32
    %8 = vector.broadcast %cst_4 : f32 to vector<2x128xf32>
    %9 = arith.maximumf %7, %8 : vector<2x128xf32>
    %c1_i32 = arith.constant 1 : i32
    %10 = arith.muli %arg0, %c1_i32 : i32
    %11 = arith.addi %10, %arg1 : i32
    %c2_i32 = arith.constant 2 : i32
    %12 = arith.muli %11, %c2_i32 : i32
    %c2_i32_5 = arith.constant 2 : i32
    %13 = arith.addi %12, %c2_i32_5 : i32
    %c128_i32 = arith.constant 128 : i32
    %14 = arith.muli %13, %c128_i32 : i32
    %c256_i32 = arith.constant 256 : i32
    %15 = arith.cmpi sle, %14, %c256_i32 : i32
    %16 = arith.extui %15 : i1 to i32
    %c0_i32_6 = arith.constant 0 : i32
    %17 = arith.cmpi ne, %16, %c0_i32_6 : i32
    scf.if %17 {
      %c0_11 = arith.constant 0 : index
      %c0_12 = arith.constant 0 : index
      %24 = vector.load %arg6[%c0_11, %c0_12] : memref<8x128xf32, #tpu.memory_space<vmem>>, vector<2x128xf32>
      %25 = arith.addf %24, %9 : vector<2x128xf32>
      %c0_13 = arith.constant 0 : index
      %c0_14 = arith.constant 0 : index
      %26 = vector.load %arg6[%c0_13, %c0_14] : memref<8x128xf32, #tpu.memory_space<vmem>>, vector<2x128xf32>
      tpu.vector_store %arg6[%c0_13, %c0_14], %25 {strides = array<i32>} : memref<8x128xf32, #tpu.memory_space<vmem>>, vector<2x128xf32>,
    } else {
    }
    %c256_i32_7 = arith.constant 256 : i32
    %18 = arith.cmpi sgt, %14, %c256_i32_7 : i32
    %19 = arith.extui %18 : i1 to i32
    %c0_i32_8 = arith.constant 0 : i32
    %20 = arith.cmpi ne, %19, %c0_i32_8 : i32
    scf.if %20 {
      %24 = tpu.iota {dimensions = array<i32: 0>} : vector<2x128xi32>
      %25 = tpu.iota {dimensions = array<i32: 1>} : vector<2x128xi32>
      %26 = vector.broadcast %12 : i32 to vector<2x128xi32>
      %27 = arith.addi %26, %24 : vector<2x128xi32>
      %c128_i32_11 = arith.constant 128 : i32
      %28 = vector.broadcast %c128_i32_11 : i32 to vector<2x128xi32>
      %29 = arith.muli %27, %28 : vector<2x128xi32>
      %30 = arith.addi %29, %25 : vector<2x128xi32>
      %c256_i32_12 = arith.constant 256 : i32
      %31 = vector.broadcast %c256_i32_12 : i32 to vector<2x128xi32>
      %32 = arith.cmpi slt, %30, %31 : vector<2x128xi32>
      %cst_13 = arith.constant 0.000000e+00 : f32
      %33 = vector.broadcast %cst_13 : f32 to vector<2x128xf32>
      %34 = arith.select %32, %9, %33 : vector<2x128xi1>, vector<2x128xf32>
      %c0_14 = arith.constant 0 : index
      %c0_15 = arith.constant 0 : index
      %35 = vector.load %arg6[%c0_14, %c0_15] : memref<8x128xf32, #tpu.memory_space<vmem>>, vector<2x128xf32>
      %36 = arith.addf %35, %34 : vector<2x128xf32>
      %c0_16 = arith.constant 0 : index
      %c0_17 = arith.constant 0 : index
      %37 = vector.load %arg6[%c0_16, %c0_17] : memref<8x128xf32, #tpu.memory_space<vmem>>, vector<2x128xf32>
      tpu.vector_store %arg6[%c0_16, %c0_17], %36 {strides = array<i32>} : memref<8x128xf32, #tpu.memory_space<vmem>>, vector<2x128xf32>,
    } else {
    }
    %c0_i32_9 = arith.constant 0 : i32
    %21 = arith.cmpi eq, %arg1, %c0_i32_9 : i32
    %22 = arith.extui %21 : i1 to i32
    %c0_i32_10 = arith.constant 0 : i32
    %23 = arith.cmpi ne, %22, %c0_i32_10 : i32
    scf.if %23 {
      %c0_11 = arith.constant 0 : index
      %24 = memref.load %arg2[%c0_11] : memref<1xf32, #tpu.memory_space<smem>>
      %cst_12 = arith.constant 3.906250e-03 : f32
      %25 = arith.mulf %24, %cst_12 : f32
      %c0_13 = arith.constant 0 : index
      %c0_14 = arith.constant 0 : index
      %26 = vector.load %arg6[%c0_13, %c0_14] : memref<8x128xf32, #tpu.memory_space<vmem>>, vector<8x128xf32>
      %27 = vector.broadcast %25 : f32 to vector<8x128xf32>
      %28 = arith.mulf %26, %27 : vector<8x128xf32>
      %29 = vector.shape_cast %28 : vector<8x128xf32> to vector<1x8x128xf32>
      %cst_15 = arith.constant dense<0.000000e+00> : vector<1xf32>
      %30 = vector.multi_reduction <add>, %29, %cst_15 [1, 2] : vector<1x8x128xf32> to vector<1xf32>
      %31 = vector.shape_cast %30 : vector<1xf32> to vector<1x1x1xf32>
      %32 = vector.extract %31[0, 0, 0] : f32 from vector<1x1x1xf32>
      %33 = vector.broadcast %32 : f32 to vector<1x1xf32>
      %c0_16 = arith.constant 0 : index
      %c0_17 = arith.constant 0 : index
      %34 = vector.load %arg5[%c0_16, %c0_17] : memref<1x1xf32, #tpu.memory_space<vmem>>, vector<1x1xf32>
      tpu.vector_store %arg5[%c0_16, %c0_17], %33 {strides = array<i32>} : memref<1x1xf32, #tpu.memory_space<vmem>>, vector<1x1xf32>,
    } else {
    }
    return
  }
  func.func @transform_0(%arg0: i32, %arg1: i32) -> i32 {
    %c0_i32 = arith.constant 0 : i32
    %c0_i32_0 = arith.constant 0 : i32
    return %c0_i32 : i32
  }
  func.func @transform_1(%arg0: i32, %arg1: i32) -> (i32, i32) {
    %c1_i32 = arith.constant 1 : i32
    %0 = arith.muli %arg0, %c1_i32 : i32
    %1 = arith.addi %0, %arg1 : i32
    %c0_i32 = arith.constant 0 : i32
    %2 = arith.minsi %1, %c0_i32 : i32
    %c0_i32_0 = arith.constant 0 : i32
    %c0_i32_1 = arith.constant 0 : i32
    return %2, %c0_i32_0 : i32, i32
  }
  func.func @transform_2(%arg0: i32, %arg1: i32) -> (i32, i32) {
    %c1_i32 = arith.constant 1 : i32
    %0 = arith.muli %arg0, %c1_i32 : i32
    %1 = arith.addi %0, %arg1 : i32
    %c0_i32 = arith.constant 0 : i32
    %2 = arith.minsi %1, %c0_i32 : i32
    %c0_i32_0 = arith.constant 0 : i32
    %c0_i32_1 = arith.constant 0 : i32
    return %2, %c0_i32_0 : i32, i32
  }
  func.func @transform_3(%arg0: i32, %arg1: i32) -> (i32, i32) {
    %c0_i32 = arith.constant 0 : i32
    %c0_i32_0 = arith.constant 0 : i32
    %c0_i32_1 = arith.constant 0 : i32
    return %c0_i32, %c0_i32_0 : i32, i32
  }
}

</mosaic_0001>

<llo_original>
// kernel: tpu_custom_call.1
$region0: #{tpu_custom_call.1}
  #allocation0 [shape = 'u32[]', space=smem, size = 0x4, offset = 0x4, fixed_abs, tag = 'smem constant byte address 0x4 - core index']
  #allocation1 [shape = 'u32[144,128]{1,0:T(1,128)}', space=vmem, size = 0x12000, scoped, tag = 'internal scratch']
  #allocation2 [shape = 'f32[8,128]{1,0:T(8,128)}', space=vmem, size = 0x1000, scoped, tag = 'scratch operand']
  #allocation3 [shape = 'f32[1]{0:T(128)S(6)}', space=smem, size = 0x200, scoped, tag = 'scoped memory for tpu_custom_call.1']
  %s0 = inlined_call_operand.<no memory space> [shape: f32[1], index: 0, kind: input, shape index: {}]
  %s1 = inlined_call_operand.vmem [shape: f32[2,128], index: 1, kind: input, shape index: {}]
  %s2 = inlined_call_operand.vmem [shape: f32[2,128], index: 2, kind: input, shape index: {}]
  %s3 = inlined_call_operand.hbm [shape: f32[1,1], index: 3, kind: output, shape index: {}]
  %s4 = sld [smem:[#allocation0]]
  $region38: #{tpu_custom_call.1} parent=0
    _
  %s6 = ssub.s32 1, %s4
  %s7 = scalar_select 0, %s6, %s4
  %8 = sst [smem:[#allocation3]] %s0
  $region1: #{tpu_custom_call.1} parent=0
    #allocation4 [shape = 'u8[512]{0}', space=vmem, size = 0x400, scoped, tag = 'output window, operand 0, single buffered']
    #allocation5 [shape = 's32[1]{0}', space=sflag, size = 0x4, scoped, tag = 'scoped memory for tpu_custom_call.1']
    %9 = vsyncpa [#allocation5], 0
    // Predicated region
    $region2: #{tpu_custom_call.1} parent=1 // pred_check
      _
    $region3: #{tpu_custom_call.1} parent=1 // pred_check_branch
      %11 = sbr.rel (0) target = $region5
    $region4: #{tpu_custom_call.1} parent=1 // pred_region
      _
    $region5: #{tpu_custom_call.1} parent=1 // pred_fallthru
      _
    // Predicated region
    $region6: #{tpu_custom_call.1} parent=1 // pred_check
      _
    $region7: #{tpu_custom_call.1} parent=1 // pred_check_branch
      %13 = sbr.rel (0) target = $region9
    $region8: #{tpu_custom_call.1} parent=1 // pred_region
      %s14 = sadd.s32 0, 0
      %p15 = scmp.lt.s32.totalorder %s14, 0
      %s16 = scalar_select %p15, %s14, 0
      %p17 = scmp.lt.s32.totalorder %s16, 0
      %s18 = scalar_select %p17, %s16, 0
      %s19 = smul.addr %s18, 2
      %s20 = scalar_lea.vmem %s1, %s19
      %s21 = sadd.s32 0, 0
      %p22 = scmp.lt.s32.totalorder %s21, 0
      %s23 = scalar_select %p22, %s21, 0
    $region9: #{tpu_custom_call.1} parent=1 // pred_fallthru
      _
    // Predicated region
    $region10: #{tpu_custom_call.1} parent=1 // pred_check
      _
    $region11: #{tpu_custom_call.1} parent=1 // pred_check_branch
      %25 = sbr.rel (0) target = $region13
    $region12: #{tpu_custom_call.1} parent=1 // pred_region
      %s26 = sadd.s32 0, 0
      %p27 = scmp.lt.s32.totalorder %s26, 0
      %s28 = scalar_select %p27, %s26, 0
      %p29 = scmp.lt.s32.totalorder %s28, 0
      %s30 = scalar_select %p29, %s28, 0
      %s31 = smul.addr %s30, 2
      %s32 = scalar_lea.vmem %s2, %s31
      %s33 = sadd.s32 0, 0
      %p34 = scmp.lt.s32.totalorder %s33, 0
      %s35 = scalar_select %p34, %s33, 0
    $region13: #{tpu_custom_call.1} parent=1 // pred_fallthru
      _
    %s36 = sadd.s32 0, 0
    %p37 = scmp.lt.s32.totalorder %s36, 0
    %s38 = scalar_select %p37, %s36, 0
    %p39 = scmp.lt.s32.totalorder %s38, 0
    %s40 = scalar_select %p39, %s38, 0
    %s41 = smul.addr %s40, 2
    %s42 = scalar_lea.vmem %s1, %s41
    %s43 = sadd.s32 0, 0
    %p44 = scmp.lt.s32.totalorder %s43, 0
    %s45 = scalar_select %p44, %s43, 0
    %p46 = scmp.lt.s32.totalorder %s45, 0
    %s47 = scalar_select %p46, %s45, 0
    %s48 = smul.addr %s47, 2
    %s49 = scalar_lea.vmem %s2, %s48
    %s50 = sadd.s32 0, 0
    %p51 = scmp.lt.s32.totalorder %s50, 0
    %s52 = scalar_select %p51, %s50, 0
    %p53 = scmp.lt.s32.totalorder %s52, 0
    %s54 = scalar_select %p53, %s52, 0
    %s55 = smul.addr %s54, 2
    %s56 = scalar_lea.vmem %s1, %s55
    %s57 = sadd.s32 0, 0
    %p58 = scmp.lt.s32.totalorder %s57, 0
    %s59 = scalar_select %p58, %s57, 0
    %s60 = sadd.s32 0, 0
    %p61 = scmp.lt.s32.totalorder %s60, 0
    %s62 = scalar_select %p61, %s60, 0
    %p63 = scmp.lt.s32.totalorder %s62, 0
    %s64 = scalar_select %p63, %s62, 0
    %s65 = smul.addr %s64, 2
    %s66 = scalar_lea.vmem %s2, %s65
    %s67 = sadd.s32 0, 0
    %p68 = scmp.lt.s32.totalorder %s67, 0
    %s69 = scalar_select %p68, %s67, 0
    %p70 = scmp.eq.s32.totalorder 0, 0
    // Predicated region
    $region14: #{tpu_custom_call.1} parent=1 // pred_check
      %p71 = pneg %p70
    $region15: #{tpu_custom_call.1} parent=1 // pred_check_branch
      %73 = sbr.rel (%p71) target = $region17
    $region16: #{tpu_custom_call.1} parent=1 // pred_region
      %74 = vst [vmem:[#allocation2] sm:$0xff] 0.0
    $region17: #{tpu_custom_call.1} parent=1 // pred_fallthru
      _
    %v75 = vld [vmem:[%s56] sm:$0x3]
    %v76 = vld [vmem:[%s66] sm:$0x3]
    %v77 = vsub.f32 %v76, %v75
    %v78 = vadd.f32 %v77, 0.2
    %v79 = vmax.f32 %v78, 0.0
    %s80 = sadd.s32 0, 0
    %s81 = smul.u32 %s80, 2
    %s82 = sadd.s32 %s81, 2
    %s83 = smul.u32 %s82, 128
    %p84 = scmp.le.s32.totalorder %s83, 256
    // Predicated region
    $region18: #{tpu_custom_call.1} parent=1 // pred_check
      %p85 = pneg %p84
    $region19: #{tpu_custom_call.1} parent=1 // pred_check_branch
      %87 = sbr.rel (%p85) target = $region21
    $region20: #{tpu_custom_call.1} parent=1 // pred_region
      %v88 = vld [vmem:[#allocation2] sm:$0x3]
      %v89 = vadd.f32 %v88, %v79
      %90 = vst [vmem:[#allocation2] sm:$0x3] %v89
    $region21: #{tpu_custom_call.1} parent=1 // pred_fallthru
      _
    %p91 = scmp.gt.s32.totalorder %s83, 256
    // Predicated region
    $region22: #{tpu_custom_call.1} parent=1 // pred_check
      %p92 = pneg %p91
    $region23: #{tpu_custom_call.1} parent=1 // pred_check_branch
      %94 = sbr.rel (%p92) target = $region25
    $region24: #{tpu_custom_call.1} parent=1 // pred_region
      %v95 = vlaneseq
      %v96 = vshrl.u32 %v95, 7
      %v97 = vlaneseq
      %v98 = vand.u32 %v97, 127
      %v99 = vstv %s81
      %v100 = vadd.s32 %v99, %v96
      %v101 = vmul.u32 %v100, 128
      %v102 = vadd.s32 %v101, %v98
      %vm103 = vcmp.lt.s32.totalorder %v102, 256
      %v104 = vsel %vm103, %v79, 0.0
      %v105 = vld [vmem:[#allocation2] sm:$0x3]
      %v106 = vadd.f32 %v105, %v104
      %107 = vst [vmem:[#allocation2] sm:$0x3] %v106
    $region25: #{tpu_custom_call.1} parent=1 // pred_fallthru
      _
    // Predicated region
    $region26: #{tpu_custom_call.1} parent=1 // pred_check
      %p108 = pneg %p70
    $region27: #{tpu_custom_call.1} parent=1 // pred_check_branch
      %110 = sbr.rel (%p108) target = $region29
    $region28: #{tpu_custom_call.1} parent=1 // pred_region
      %s111 = sld [smem:[#allocation3]]
      %s112 = smul.f32 %s111, 0.00390625
      %v113 = vld [vmem:[#allocation2] sm:$0xff]
      %v114 = vstv %s112
      %v115 = vmul.f32 %v113, %v114
      %116 = vadd.xlane.f32.xlu0 %v115
      %v117 = vpop.xlane.xlu0 %116
      %v118 = vrot.slane %v117, 4
      %v119 = vadd.f32 %v117, %v118
      %v120 = vrot.slane %v119, 2
      %v121 = vadd.f32 %v119, %v120
      %v122 = vrot.slane %v121, 1
      %v123 = vadd.f32 %v121, %v122
      %s124 = vtos %v123
      %v125 = vstv %s124
      %vm126 = vcmask 0
      %127 = vst.msk [vmem:[#allocation4] sm:$0x1] %vm126, %v125
    $region29: #{tpu_custom_call.1} parent=1 // pred_fallthru
      _
    // Predicated region
    $region30: #{tpu_custom_call.1} parent=1 // pred_check
      _
    $region31: #{tpu_custom_call.1} parent=1 // pred_check_branch
      %129 = sbr.rel (0) target = $region33
    $region32: #{tpu_custom_call.1} parent=1 // pred_region
      %s131 = ssub.s32 16, 16
      %132 = vsyncadd [#allocation5], %s131
      %s134 = sshll.u32 [#allocation4], 4
      %s135 = int_to_ptr.vmem [resolvable:$true] %s134
      %137 = dma.vmem_to_hbm [thread:$0]  %s135, 16, %s3, [#allocation5]
    $region33: #{tpu_custom_call.1} parent=1 // pred_fallthru
      _
    // Predicated region
    $region34: #{tpu_custom_call.1} parent=1 // pred_check
      _
    $region35: #{tpu_custom_call.1} parent=1 // pred_check_branch
      %139 = sbr.rel (0) target = $region37
    $region36: #{tpu_custom_call.1} parent=1 // pred_region
      %140 = dma.done [#allocation5], 16
    $region37: #{tpu_custom_call.1} parent=1 // pred_fallthru
      _
    %141 = vsyncpa [#allocation5], 1

</llo_original>
